<compile_context>
chip_gen: v7x
topology: tpu7x:2x2x1
jax: 0.10.0
libtpu: 0.0.40
codegen_flags: <defaults>
</compile_context>

<pallas_src>
import functools
import math

import jax
import jax.numpy as jnp
from jax.experimental import pallas as pl
from jax.experimental.pallas import tpu as pltpu


def peft_adapter_kernel(x_ref, w_ref, bias_ref, a_ref, b_ref, o_ref,
                        acc_ref, xa_ref, *, matmul_dtype):
    """One (i, j, k) grid step of out = (x @ W_kn + bias) + (x @ A) @ B.

    x_ref:    [tm, tk]  activations tile
    w_ref:    [tk, tn]  frozen weight tile, already in [K, N] (MXU-canonical) layout
    bias_ref: [1,  tn]  frozen Linear bias tile
    a_ref:    [tk, R ]  LoRA A tile
    b_ref:    [R,  tn]  LoRA B tile
    o_ref:    [tm, tn]  output tile (written only on the last K step)
    acc_ref:  [tm, tn]  f32 VMEM accumulator for the base matmul
    xa_ref:   [tm, R ]  f32 VMEM accumulator for x @ A (filled at j == 0, reused j > 0)
    """
    j = pl.program_id(1)
    k = pl.program_id(2)

    x = x_ref[...].astype(matmul_dtype)
    w = w_ref[...].astype(matmul_dtype)

    # Base partial: canonical [m,k] @ [k,n] MXU contraction, f32 accumulate.
    xw = jnp.dot(x, w, preferred_element_type=jnp.float32)

    @pl.when(k == 0)
    def _():
        acc_ref[...] = xw            # first partial written directly (no zero-fill)

    @pl.when(k > 0)
    def _():
        acc_ref[...] += xw

    # LoRA first projection x @ A depends only on (i, k): compute it once per row
    # block (j == 0); scratch persists across grid steps, so all j > 0 tiles of the
    # same i reuse the finished accumulator instead of re-running the MXU pass.
    @pl.when(j == 0)
    def _():
        xa = jnp.dot(x, a_ref[...].astype(matmul_dtype),
                     preferred_element_type=jnp.float32)

        @pl.when(k == 0)
        def _():
            xa_ref[...] = xa

        @pl.when(k > 0)
        def _():
            xa_ref[...] += xa

    @pl.when(k == pl.num_programs(2) - 1)
    def _():
        # Rank-R second matmul only once per (i, j) tile, in f32.
        lora = jnp.dot(xa_ref[...], b_ref[...].astype(jnp.float32),
                       preferred_element_type=jnp.float32)
        out = acc_ref[...] + bias_ref[...].astype(jnp.float32) + lora
        o_ref[...] = out.astype(o_ref.dtype)


def _pick_tile(dim, preferred, alignments):
    """Largest tile <= preferred dividing dim, preferring the highest alignment."""
    if dim <= preferred:
        return dim
    for align in alignments:
        t = (preferred // align) * align
        while t >= align:
            if dim % t == 0:
                return t
            t -= align
    return dim  # fall back to the full (always legal) extent


def _padded_tile_bytes(shape, itemsize):
    """VMEM bytes of a tile after (8, 128) sublane/lane padding."""
    shape = tuple(shape)
    if len(shape) == 1:
        shape = (1,) + shape
    *lead, s, l = shape
    s = -(-s // 8) * 8
    l = -(-l // 128) * 128
    n = s * l
    for d in lead:
        n *= d
    return n * itemsize


def prepare_peft_params(W_out_in, bias, lora_A, lora_B, *,
                        weights_dtype=jnp.bfloat16):
    """One-time (init-time) conversion of the frozen/adapter parameters.

    W_out_in is the PyTorch nn.Linear weight [out_features, in_features]. It is
    frozen, so the transpose to the MXU-canonical [K, N] layout and the optional
    bf16 storage cast are paid once and amortized over every forward call.
    """
    w_kn = jnp.asarray(W_out_in).T
    lora_A = jnp.asarray(lora_A)
    lora_B = jnp.asarray(lora_B)
    if weights_dtype is not None:
        w_kn = w_kn.astype(weights_dtype)
        lora_A = lora_A.astype(weights_dtype)
        lora_B = lora_B.astype(weights_dtype)
    return w_kn, jnp.asarray(bias), lora_A, lora_B


def peft_adapter(x, w_kn, bias, lora_A, lora_B, *, tm=512, tn=1024, tk=1024,
                 matmul_dtype=jnp.bfloat16, out_dtype=None):
    """JAX wrapper. x: [M, K], w_kn: [K, N] (pre-transposed frozen weight),
    bias: [N], lora_A: [K, R], lora_B: [R, N]. Returns [M, N]."""
    M, K = x.shape
    Kw, N = w_kn.shape
    assert Kw == K, "w_kn must be the frozen weight pre-transposed to [K, N]"
    KA, R = lora_A.shape
    assert KA == K and lora_B.shape == (R, N) and bias.shape == (N,)

    if out_dtype is None:
        out_dtype = x.dtype
    if matmul_dtype is None:
        matmul_dtype = jnp.result_type(x.dtype, w_kn.dtype)

    bias2d = bias.reshape(1, N)

    # Tile sizes: prefer 256-aligned tn/tk (2x256x256 MXU on v6e/v7x), 128 fallback.
    tm = _pick_tile(M, tm, (256, 128, 16, 8))
    tn = _pick_tile(N, tn, (256, 128))
    tk = _pick_tile(K, tk, (256, 128))
    gm, gn, gk = M // tm, N // tn, K // tk

    isz = lambda a: jnp.dtype(a.dtype).itemsize
    out_isz = jnp.dtype(out_dtype).itemsize

    # VMEM footprint (double-buffered ins/out + persistent f32 scratch), with
    # (8, 128) padding. Cap below v7x's 64 MiB physical VMEM, leaving Mosaic
    # internal-scratch headroom.
    vmem_est = (2 * (_padded_tile_bytes((tm, tk), isz(x))
                     + _padded_tile_bytes((tk, tn), isz(w_kn))
                     + _padded_tile_bytes((1, tn), isz(bias))
                     + _padded_tile_bytes((tk, R), isz(lora_A))
                     + _padded_tile_bytes((R, tn), isz(lora_B))
                     + _padded_tile_bytes((tm, tn), out_isz))
                + _padded_tile_bytes((tm, tn), 4)
                + _padded_tile_bytes((tm, R), 4))
    vmem_cap = 48 * 1024 * 1024
    if vmem_est > vmem_cap:
        raise ValueError(
            f"Tile choice (tm={tm}, tn={tn}, tk={tk}) needs ~{vmem_est >> 20} MiB "
            f"VMEM (> {vmem_cap >> 20} MiB cap); pass smaller tm/tn/tk for shapes "
            f"M={M}, N={N}, K={K}.")
    vmem_limit = int(min(max(int(1.5 * vmem_est), 32 * 1024 * 1024), vmem_cap))

    # Honest HBM traffic: x is re-read gn times, W gm times; A/B/bias are small.
    cost = pl.CostEstimate(
        flops=2 * M * N * K + 2 * M * K * R + 2 * M * N * R,
        transcendentals=0,
        bytes_accessed=int(gn * x.size * isz(x)
                           + gm * w_kn.size * isz(w_kn)
                           + gm * bias.size * isz(bias)
                           + gm * gn * lora_A.size * isz(lora_A)
                           + gm * lora_B.size * isz(lora_B)
                           + M * N * out_isz))

    kernel = functools.partial(peft_adapter_kernel, matmul_dtype=matmul_dtype)

    return pl.pallas_call(
        kernel,
        out_shape=jax.ShapeDtypeStruct((M, N), out_dtype),
        grid=(gm, gn, gk),
        in_specs=[
            pl.BlockSpec((tm, tk), lambda i, j, k: (i, k)),   # x
            pl.BlockSpec((tk, tn), lambda i, j, k: (k, j)),   # frozen W in [K, N]
            pl.BlockSpec((1, tn), lambda i, j, k: (0, j)),    # bias
            pl.BlockSpec((tk, R), lambda i, j, k: (k, 0)),    # LoRA A
            pl.BlockSpec((R, tn), lambda i, j, k: (0, j)),    # LoRA B
        ],
        out_specs=pl.BlockSpec((tm, tn), lambda i, j, k: (i, j)),
        scratch_shapes=[
            pltpu.VMEM((tm, tn), jnp.float32),   # base accumulator
            pltpu.VMEM((tm, R), jnp.float32),    # x @ A accumulator (per row block)
        ],
        compiler_params=pltpu.CompilerParams(
            # Only i is core-parallel: the x@A scratch is filled at j == 0 and
            # reused for j > 0, so the j axis must stay on a single TensorCore.
            dimension_semantics=("parallel", "arbitrary", "arbitrary"),
            vmem_limit_bytes=vmem_limit),
        cost_estimate=cost,
    )(x, w_kn, bias2d, lora_A, lora_B)


def peft_adapter_ref(x, W, bias, A, B):
    """Pure-JAX reference (matches the PyTorch module's forward; W is [N, K])."""
    base = x @ W.T + bias
    lora = (x @ A) @ B
    return base + lora


if __name__ == "__main__":
    # Small shapes consistent with the module: batch=16, in=512, out=256, rank=8.
    # Tiles chosen so the grid is (2, 2, 2): exercises the K accumulation, the
    # j==0 LoRA-scratch reuse for j>0 tiles, and the epilogue.
    batch, in_features, out_features, rank = 16, 512, 256, 8
    tiles = dict(tm=8, tn=128, tk=256)

    key = jax.random.PRNGKey(0)
    kx, kw, kb, ka, kB = jax.random.split(key, 5)

    x = jax.random.normal(kx, (batch, in_features), dtype=jnp.float32)

    # Frozen nn.Linear parameters (synthetic), W in PyTorch [N, K] layout.
    W = jax.random.normal(kw, (out_features, in_features), dtype=jnp.float32) * 0.05
    bias = jax.random.normal(kb, (out_features,), dtype=jnp.float32) * 0.1

    # LoRA A: kaiming_uniform(a=sqrt(5)) on (in_features, rank).
    bound_a = math.sqrt(6.0 / ((1.0 + 5.0) * rank))
    lora_A = jax.random.uniform(ka, (in_features, rank), dtype=jnp.float32,
                                minval=-bound_a, maxval=bound_a)
    # The module zero-inits lora_B; use nonzero values so the LoRA path is exercised.
    lora_B = jax.random.normal(kB, (rank, out_features), dtype=jnp.float32) * 0.05

    ref = peft_adapter_ref(x, W, bias, lora_A, lora_B)

    # (1) f32-stored weights + f32 MXU feed: tight numerical check.
    w_kn32, b32, A32, B32 = prepare_peft_params(W, bias, lora_A, lora_B,
                                                weights_dtype=None)
    out_f32 = peft_adapter(x, w_kn32, b32, A32, B32,
                           matmul_dtype=jnp.float32, **tiles)
    out_f32 = jax.block_until_ready(out_f32)
    assert out_f32.shape == (batch, out_features)
    assert jnp.allclose(out_f32, ref, atol=2e-4, rtol=2e-4), "f32 mismatch vs reference"

    # (2) Default fast path: frozen W / A / B stored bf16 once at init, bf16 MXU
    # feed with f32 accumulation. Looser tolerance vs the f32 reference.
    w_kn16, b16, A16, B16 = prepare_peft_params(W, bias, lora_A, lora_B,
                                                weights_dtype=jnp.bfloat16)
    out_bf16 = peft_adapter(x, w_kn16, b16, A16, B16, **tiles)
    out_bf16 = jax.block_until_ready(out_bf16)
    assert out_bf16.shape == (batch, out_features)
    assert jnp.allclose(out_bf16, ref, atol=1e-1, rtol=5e-2), "bf16 mismatch vs reference"

    print("KERNEL_OK")
</pallas_src>

<mosaic_0001>
module attributes {stable_mosaic.version = 11 : i64} {
  func.func @peft_adapter_kernel(%arg0: i32, %arg1: i32, %arg2: i32, %arg3: memref<8x256xf32, #tpu.memory_space<vmem>>, %arg4: memref<256x128xf32, #tpu.memory_space<vmem>>, %arg5: memref<1x128xf32, #tpu.memory_space<vmem>>, %arg6: memref<256x8xf32, #tpu.memory_space<vmem>>, %arg7: memref<8x128xf32, #tpu.memory_space<vmem>>, %arg8: memref<8x128xf32, #tpu.memory_space<vmem>>, %arg9: memref<8x128xf32, #tpu.memory_space<vmem>>, %arg10: memref<8x8xf32, #tpu.memory_space<vmem>>) attributes {dimension_semantics = [#tpu.dimension_semantics<parallel>, #tpu.dimension_semantics<arbitrary>, #tpu.dimension_semantics<arbitrary>], iteration_bounds = array<i64: 2, 2, 2>, scalar_prefetch = 0 : i64, scratch_operands = 2 : i64, tpu.core_type = #tpu.core_type<tc>, window_params = [{transform_indices = @transform_0, window_bounds = array<i64: 8, 256>}, {transform_indices = @transform_1, window_bounds = array<i64: 256, 128>}, {transform_indices = @transform_2, window_bounds = array<i64: 1, 128>}, {transform_indices = @transform_3, window_bounds = array<i64: 256, 8>}, {transform_indices = @transform_4, window_bounds = array<i64: 8, 128>}, {transform_indices = @transform_5, window_bounds = array<i64: 8, 128>}]} {
    %c0 = arith.constant 0 : index
    %c0_0 = arith.constant 0 : index
    %0 = vector.load %arg3[%c0, %c0_0] : memref<8x256xf32, #tpu.memory_space<vmem>>, vector<8x256xf32>
    %c0_1 = arith.constant 0 : index
    %c0_2 = arith.constant 0 : index
    %1 = vector.load %arg4[%c0_1, %c0_2] : memref<256x128xf32, #tpu.memory_space<vmem>>, vector<256x128xf32>
    %cst = arith.constant dense<0.000000e+00> : vector<8x128xf32>
    %2 = tpu.matmul %0, %1, %cst {dimension_numbers = #tpu.dot_dimension_numbers<[1], [0], [0], [1], [0, 0, 1, 1], [], []>} : vector<8x256xf32>, vector<256x128xf32>, vector<8x128xf32> -> vector<8x128xf32>
    %c0_i32 = arith.constant 0 : i32
    %3 = arith.cmpi eq, %arg2, %c0_i32 : i32
    %4 = arith.extui %3 : i1 to i32
    %c0_i32_3 = arith.constant 0 : i32
    %5 = arith.cmpi ne, %4, %c0_i32_3 : i32
    scf.if %5 {
      %c0_9 = arith.constant 0 : index
      %c0_10 = arith.constant 0 : index
      %15 = vector.load %arg9[%c0_9, %c0_10] : memref<8x128xf32, #tpu.memory_space<vmem>>, vector<8x128xf32>
      tpu.vector_store %arg9[%c0_9, %c0_10], %2 {strides = array<i32>} : memref<8x128xf32, #tpu.memory_space<vmem>>, vector<8x128xf32>,
    } else {
    }
    %c0_i32_4 = arith.constant 0 : i32
    %6 = arith.cmpi sgt, %arg2, %c0_i32_4 : i32
    %7 = arith.extui %6 : i1 to i32
    %c0_i32_5 = arith.constant 0 : i32
    %8 = arith.cmpi ne, %7, %c0_i32_5 : i32
    scf.if %8 {
      %c0_9 = arith.constant 0 : index
      %c0_10 = arith.constant 0 : index
      %15 = vector.load %arg9[%c0_9, %c0_10] : memref<8x128xf32, #tpu.memory_space<vmem>>, vector<8x128xf32>
      %16 = arith.addf %15, %2 : vector<8x128xf32>
      %c0_11 = arith.constant 0 : index
      %c0_12 = arith.constant 0 : index
      %17 = vector.load %arg9[%c0_11, %c0_12] : memref<8x128xf32, #tpu.memory_space<vmem>>, vector<8x128xf32>
      tpu.vector_store %arg9[%c0_11, %c0_12], %16 {strides = array<i32>} : memref<8x128xf32, #tpu.memory_space<vmem>>, vector<8x128xf32>,
    } else {
    }
    %c0_i32_6 = arith.constant 0 : i32
    %9 = arith.cmpi eq, %arg1, %c0_i32_6 : i32
    %10 = arith.extui %9 : i1 to i32
    %c0_i32_7 = arith.constant 0 : i32
    %11 = arith.cmpi ne, %10, %c0_i32_7 : i32
    scf.if %11 {
      %c0_9 = arith.constant 0 : index
      %c0_10 = arith.constant 0 : index
      %15 = vector.load %arg6[%c0_9, %c0_10] : memref<256x8xf32, #tpu.memory_space<vmem>>, vector<256x8xf32>
      %cst_11 = arith.constant dense<0.000000e+00> : vector<8x8xf32>
      %16 = tpu.matmul %0, %15, %cst_11 {dimension_numbers = #tpu.dot_dimension_numbers<[1], [0], [0], [1], [0, 0, 1, 1], [], []>} : vector<8x256xf32>, vector<256x8xf32>, vector<8x8xf32> -> vector<8x8xf32>
      %c0_i32_12 = arith.constant 0 : i32
      %17 = arith.cmpi eq, %arg2, %c0_i32_12 : i32
      %18 = arith.extui %17 : i1 to i32
      %c0_i32_13 = arith.constant 0 : i32
      %19 = arith.cmpi ne, %18, %c0_i32_13 : i32
      scf.if %19 {
        %c0_16 = arith.constant 0 : index
        %c0_17 = arith.constant 0 : index
        %23 = vector.load %arg10[%c0_16, %c0_17] : memref<8x8xf32, #tpu.memory_space<vmem>>, vector<8x8xf32>
        tpu.vector_store %arg10[%c0_16, %c0_17], %16 {strides = array<i32>} : memref<8x8xf32, #tpu.memory_space<vmem>>, vector<8x8xf32>,
      } else {
      }
      %c0_i32_14 = arith.constant 0 : i32
      %20 = arith.cmpi sgt, %arg2, %c0_i32_14 : i32
      %21 = arith.extui %20 : i1 to i32
      %c0_i32_15 = arith.constant 0 : i32
      %22 = arith.cmpi ne, %21, %c0_i32_15 : i32
      scf.if %22 {
        %c0_16 = arith.constant 0 : index
        %c0_17 = arith.constant 0 : index
        %23 = vector.load %arg10[%c0_16, %c0_17] : memref<8x8xf32, #tpu.memory_space<vmem>>, vector<8x8xf32>
        %24 = arith.addf %23, %16 : vector<8x8xf32>
        %c0_18 = arith.constant 0 : index
        %c0_19 = arith.constant 0 : index
        %25 = vector.load %arg10[%c0_18, %c0_19] : memref<8x8xf32, #tpu.memory_space<vmem>>, vector<8x8xf32>
        tpu.vector_store %arg10[%c0_18, %c0_19], %24 {strides = array<i32>} : memref<8x8xf32, #tpu.memory_space<vmem>>, vector<8x8xf32>,
      } else {
      }
    } else {
    }
    %c1_i32 = arith.constant 1 : i32
    %12 = arith.cmpi eq, %arg2, %c1_i32 : i32
    %13 = arith.extui %12 : i1 to i32
    %c0_i32_8 = arith.constant 0 : i32
    %14 = arith.cmpi ne, %13, %c0_i32_8 : i32
    scf.if %14 {
      %c0_9 = arith.constant 0 : index
      %c0_10 = arith.constant 0 : index
      %15 = vector.load %arg10[%c0_9, %c0_10] : memref<8x8xf32, #tpu.memory_space<vmem>>, vector<8x8xf32>
      %c0_11 = arith.constant 0 : index
      %c0_12 = arith.constant 0 : index
      %16 = vector.load %arg7[%c0_11, %c0_12] : memref<8x128xf32, #tpu.memory_space<vmem>>, vector<8x128xf32>
      %cst_13 = arith.constant dense<0.000000e+00> : vector<8x128xf32>
      %17 = tpu.matmul %15, %16, %cst_13 {dimension_numbers = #tpu.dot_dimension_numbers<[1], [0], [0], [1], [0, 0, 1, 1], [], []>} : vector<8x8xf32>, vector<8x128xf32>, vector<8x128xf32> -> vector<8x128xf32>
      %c0_14 = arith.constant 0 : index
      %c0_15 = arith.constant 0 : index
      %18 = vector.load %arg9[%c0_14, %c0_15] : memref<8x128xf32, #tpu.memory_space<vmem>>, vector<8x128xf32>
      %c0_16 = arith.constant 0 : index
      %c0_17 = arith.constant 0 : index
      %19 = vector.load %arg5[%c0_16, %c0_17] : memref<1x128xf32, #tpu.memory_space<vmem>>, vector<1x128xf32>
      %20 = vector.broadcast %19 : vector<1x128xf32> to vector<8x128xf32>
      %21 = arith.addf %18, %20 : vector<8x128xf32>
      %22 = arith.addf %21, %17 : vector<8x128xf32>
      %c0_18 = arith.constant 0 : index
      %c0_19 = arith.constant 0 : index
      %23 = vector.load %arg8[%c0_18, %c0_19] : memref<8x128xf32, #tpu.memory_space<vmem>>, vector<8x128xf32>
      tpu.vector_store %arg8[%c0_18, %c0_19], %22 {strides = array<i32>} : memref<8x128xf32, #tpu.memory_space<vmem>>, vector<8x128xf32>,
    } else {
    }
    return
  }
  func.func @transform_0(%arg0: i32, %arg1: i32, %arg2: i32) -> (i32, i32) {
    %c0_i32 = arith.constant 0 : i32
    return %arg0, %arg2 : i32, i32
  }
  func.func @transform_1(%arg0: i32, %arg1: i32, %arg2: i32) -> (i32, i32) {
    %c0_i32 = arith.constant 0 : i32
    return %arg2, %arg1 : i32, i32
  }
  func.func @transform_2(%arg0: i32, %arg1: i32, %arg2: i32) -> (i32, i32) {
    %c0_i32 = arith.constant 0 : i32
    %c0_i32_0 = arith.constant 0 : i32
    return %c0_i32, %arg1 : i32, i32
  }
  func.func @transform_3(%arg0: i32, %arg1: i32, %arg2: i32) -> (i32, i32) {
    %c0_i32 = arith.constant 0 : i32
    %c0_i32_0 = arith.constant 0 : i32
    return %arg2, %c0_i32 : i32, i32
  }
  func.func @transform_4(%arg0: i32, %arg1: i32, %arg2: i32) -> (i32, i32) {
    %c0_i32 = arith.constant 0 : i32
    %c0_i32_0 = arith.constant 0 : i32
    return %c0_i32, %arg1 : i32, i32
  }
  func.func @transform_5(%arg0: i32, %arg1: i32, %arg2: i32) -> (i32, i32) {
    %c0_i32 = arith.constant 0 : i32
    return %arg0, %arg1 : i32, i32
  }
}

</mosaic_0001>

<llo_original>
// kernel: tpu_custom_call.1
$region0: #{tpu_custom_call.1}
  #allocation0 [shape = 'u32[]', space=smem, size = 0x4, offset = 0x4, fixed_abs, tag = 'smem constant byte address 0x4 - core index']
  #allocation1 [shape = 'u32[144,128]{1,0:T(1,128)}', space=vmem, size = 0x12000, scoped, tag = 'internal scratch']
  #allocation2 [shape = 'f32[8,128]{1,0:T(8,128)}', space=vmem, size = 0x1000, scoped, tag = 'scratch operand']
  #allocation3 [shape = 'f32[8,8]{1,0:T(8,128)}', space=vmem, size = 0x1000, scoped, tag = 'scratch operand']
  %s0 = inlined_call_operand.vmem [shape: f32[16,512], index: 0, kind: input, shape index: {}]
  %s1 = inlined_call_operand.hbm [shape: f32[512,256], index: 1, kind: input, shape index: {}]
  %s2 = inlined_call_operand.vmem [shape: f32[1,256], index: 2, kind: input, shape index: {}]
  %s3 = inlined_call_operand.vmem [shape: f32[512,8], index: 3, kind: input, shape index: {}]
  %s4 = inlined_call_operand.vmem [shape: f32[8,256], index: 4, kind: input, shape index: {}]
  %s5 = inlined_call_operand.hbm [shape: f32[16,256], index: 5, kind: output, shape index: {}]
  %s6 = sld [smem:[#allocation0]]
  $region81: #{tpu_custom_call.1} parent=0
    _
  %s8 = ssub.s32 1, %s6
  %s9 = scalar_select 0, %s8, %s6
  $region1: #{tpu_custom_call.1} parent=0
    #allocation4 [shape = 'u8[262144]{0}', space=vmem, size = 0x40000, scoped, tag = 'input window, operand 1']
    #allocation5 [shape = 's32[2]{0}', space=sflag, size = 0x8, scoped, tag = 'scoped memory for tpu_custom_call.1']
    #allocation6 [shape = 's32[2]{0}', space=sflag, size = 0x8, scoped, tag = 'scoped memory for tpu_custom_call.1']
    #allocation7 [shape = 'u8[8192]{0}', space=vmem, size = 0x2000, scoped, tag = 'output window, operand 0']
    %10 = vsyncpa [#allocation5], 0
    %s11 = scalar_lea.sflag [#allocation5], 1
    %12 = vsyncpa %s11, 0
    %13 = vsyncpa [#allocation6], 0
    %s14 = scalar_lea.sflag [#allocation6], 1
    %15 = vsyncpa %s14, 0
    loop: start=0, step=1, limit=10
    $region2: #{tpu_custom_call.1} parent=1 // loop_pre_header
      _
    $region3: #{tpu_custom_call.1} parent=1 // loop_header
      %s17 = sphi 0, %s21
      %p18 = scmp.ge.s32.totalorder %s17, 10
      %s24 = sphi 0, %s43
      %s25 = sphi 0, %s39
      %s26 = sphi 0, %s35
      %s27 = sphi 0, %s24
      %s28 = sphi 0, %s25
      %s29 = sphi 0, %s26
      %s30 = sphi 0, %s27
      %s31 = sphi 0, %s28
      %s32 = sphi 0, %s29
      %s48 = sphi 0, %s50
      %s51 = sphi 0, %s48
      %s52 = sphi 0, %s51
      %s68 = sphi 0, %s52
      %s76 = sphi 0, %s78
      %s79 = sphi 0, %s76
      %s80 = sphi 0, %s79
      %s96 = sphi 0, %s80
      %s102 = sphi 0, %s104
      %s105 = sphi 0, %s102
      %s106 = sphi 0, %s105
      %s122 = sphi 0, %s106
      %s128 = sphi 0, %s130
      %s131 = sphi 0, %s128
      %s132 = sphi 0, %s131
      %s148 = sphi 0, %s132
      %s154 = sphi 0, %s156
      %s157 = sphi 0, %s154
      %s158 = sphi 0, %s157
      %s174 = sphi 0, %s158
      %s182 = sphi 0, %s184
      %s185 = sphi 0, %s182
      %s186 = sphi 0, %s185
      %s202 = sphi 0, %s186
    $region4: #{tpu_custom_call.1} parent=1 // loop_header_branch
      %20 = sbr.rel (%p18) target = $region8
    $region5: #{tpu_custom_call.1} parent=1 // loop_body
      %s22 = ssub.s32 %s17, 1
      %s23 = ssub.s32 %s17, 2
      %s33 = sadd.s32 1, %s26
      %p34 = scmp.ge.s32.totalorder %s33, 2
      %s35 = scalar_select %p34, 0, %s33
      %s36 = sadd.s32 1, %s25
      %s37 = scalar_select %p34, %s36, %s25
      %p38 = scmp.ge.s32.totalorder %s37, 2
      %s39 = scalar_select %p38, 0, %s37
      %s40 = sadd.s32 1, %s24
      %s41 = scalar_select %p38, %s40, %s24
      %p42 = scmp.ge.s32.totalorder %s41, 2
      %s43 = scalar_select %p42, 0, %s41
      %s44 = ssub.s32 %s24, %s43
      %s45 = ssub.s32 %s26, %s35
      %s46 = sor.u32 %s44, %s45
      %p47 = scmp.eq.s32.totalorder %s46, 0
      %s49 = sadd.s32 %s48, 1
      %s50 = scalar_select %p47, %s48, %s49
      %p53 = pneg %p47
      %p54 = scmp.eq.s32.totalorder %s17, 7
      %p55 = por %p53, %p54
      %p56 = scmp.ne.s32.totalorder %s48, %s51
      %p57 = scmp.eq.s32.totalorder %s17, 0
      %p58 = por %p56, %p57
      %p59 = scmp.ne.s32.totalorder %s48, %s51
      %p60 = scmp.eq.s32.totalorder %s22, 7
      %p61 = por %p59, %p60
      %p62 = scmp.ne.s32.totalorder %s51, %s52
      %p63 = scmp.eq.s32.totalorder %s22, 0
      %p64 = por %p62, %p63
      %p65 = scmp.ne.s32.totalorder %s51, %s52
      %p66 = scmp.eq.s32.totalorder %s23, 7
      %p67 = por %p65, %p66
      %p69 = scmp.ne.s32.totalorder %s52, %s68
      %p70 = scmp.eq.s32.totalorder %s23, 0
      %p71 = por %p69, %p70
      %s72 = ssub.s32 %s26, %s35
      %s73 = ssub.s32 %s25, %s39
      %s74 = sor.u32 %s72, %s73
      %p75 = scmp.eq.s32.totalorder %s74, 0
      %s77 = sadd.s32 %s76, 1
      %s78 = scalar_select %p75, %s76, %s77
      %p81 = pneg %p75
      %p82 = scmp.eq.s32.totalorder %s17, 7
      %p83 = por %p81, %p82
      %p84 = scmp.ne.s32.totalorder %s76, %s79
      %p85 = scmp.eq.s32.totalorder %s17, 0
      %p86 = por %p84, %p85
      %p87 = scmp.ne.s32.totalorder %s76, %s79
      %p88 = scmp.eq.s32.totalorder %s22, 7
      %p89 = por %p87, %p88
      %p90 = scmp.ne.s32.totalorder %s79, %s80
      %p91 = scmp.eq.s32.totalorder %s22, 0
      %p92 = por %p90, %p91
      %p93 = scmp.ne.s32.totalorder %s79, %s80
      %p94 = scmp.eq.s32.totalorder %s23, 7
      %p95 = por %p93, %p94
      %p97 = scmp.ne.s32.totalorder %s80, %s96
      %p98 = scmp.eq.s32.totalorder %s23, 0
      %p99 = por %p97, %p98
      %s100 = ssub.s32 %s25, %s39
      %p101 = scmp.eq.s32.totalorder %s100, 0
      %s103 = sadd.s32 %s102, 1
      %s104 = scalar_select %p101, %s102, %s103
      %p107 = pneg %p101
      %p108 = scmp.eq.s32.totalorder %s17, 7
      %p109 = por %p107, %p108
      %p110 = scmp.ne.s32.totalorder %s102, %s105
      %p111 = scmp.eq.s32.totalorder %s17, 0
      %p112 = por %p110, %p111
      %p113 = scmp.ne.s32.totalorder %s102, %s105
      %p114 = scmp.eq.s32.totalorder %s22, 7
      %p115 = por %p113, %p114
      %p116 = scmp.ne.s32.totalorder %s105, %s106
      %p117 = scmp.eq.s32.totalorder %s22, 0
      %p118 = por %p116, %p117
      %p119 = scmp.ne.s32.totalorder %s105, %s106
      %p120 = scmp.eq.s32.totalorder %s23, 7
      %p121 = por %p119, %p120
      %p123 = scmp.ne.s32.totalorder %s106, %s122
      %p124 = scmp.eq.s32.totalorder %s23, 0
      %p125 = por %p123, %p124
      %s126 = ssub.s32 %s26, %s35
      %p127 = scmp.eq.s32.totalorder %s126, 0
      %s129 = sadd.s32 %s128, 1
      %s130 = scalar_select %p127, %s128, %s129
      %p133 = pneg %p127
      %p134 = scmp.eq.s32.totalorder %s17, 7
      %p135 = por %p133, %p134
      %p136 = scmp.ne.s32.totalorder %s128, %s131
      %p137 = scmp.eq.s32.totalorder %s17, 0
      %p138 = por %p136, %p137
      %p139 = scmp.ne.s32.totalorder %s128, %s131
      %p140 = scmp.eq.s32.totalorder %s22, 7
      %p141 = por %p139, %p140
      %p142 = scmp.ne.s32.totalorder %s131, %s132
      %p143 = scmp.eq.s32.totalorder %s22, 0
      %p144 = por %p142, %p143
      %p145 = scmp.ne.s32.totalorder %s131, %s132
      %p146 = scmp.eq.s32.totalorder %s23, 7
      %p147 = por %p145, %p146
      %p149 = scmp.ne.s32.totalorder %s132, %s148
      %p150 = scmp.eq.s32.totalorder %s23, 0
      %p151 = por %p149, %p150
      %s152 = ssub.s32 %s25, %s39
      %p153 = scmp.eq.s32.totalorder %s152, 0
      %s155 = sadd.s32 %s154, 1
      %s156 = scalar_select %p153, %s154, %s155
      %p159 = pneg %p153
      %p160 = scmp.eq.s32.totalorder %s17, 7
      %p161 = por %p159, %p160
      %p162 = scmp.ne.s32.totalorder %s154, %s157
      %p163 = scmp.eq.s32.totalorder %s17, 0
      %p164 = por %p162, %p163
      %p165 = scmp.ne.s32.totalorder %s154, %s157
      %p166 = scmp.eq.s32.totalorder %s22, 7
      %p167 = por %p165, %p166
      %p168 = scmp.ne.s32.totalorder %s157, %s158
      %p169 = scmp.eq.s32.totalorder %s22, 0
      %p170 = por %p168, %p169
      %p171 = scmp.ne.s32.totalorder %s157, %s158
      %p172 = scmp.eq.s32.totalorder %s23, 7
      %p173 = por %p171, %p172
      %p175 = scmp.ne.s32.totalorder %s158, %s174
      %p176 = scmp.eq.s32.totalorder %s23, 0
      %p177 = por %p175, %p176
      %s178 = ssub.s32 %s24, %s43
      %s179 = ssub.s32 %s25, %s39
      %s180 = sor.u32 %s178, %s179
      %p181 = scmp.eq.s32.totalorder %s180, 0
      %s183 = sadd.s32 %s182, 1
      %s184 = scalar_select %p181, %s182, %s183
      %p187 = pneg %p181
      %p188 = scmp.eq.s32.totalorder %s17, 7
      %p189 = por %p187, %p188
      %p190 = scmp.ne.s32.totalorder %s182, %s185
      %p191 = scmp.eq.s32.totalorder %s17, 0
      %p192 = por %p190, %p191
      %p193 = scmp.ne.s32.totalorder %s182, %s185
      %p194 = scmp.eq.s32.totalorder %s22, 7
      %p195 = por %p193, %p194
      %p196 = scmp.ne.s32.totalorder %s185, %s186
      %p197 = scmp.eq.s32.totalorder %s22, 0
      %p198 = por %p196, %p197
      %p199 = scmp.ne.s32.totalorder %s185, %s186
      %p200 = scmp.eq.s32.totalorder %s23, 7
      %p201 = por %p199, %p200
      %p203 = scmp.ne.s32.totalorder %s186, %s202
      %p204 = scmp.eq.s32.totalorder %s23, 0
      %p205 = por %p203, %p204
      %p206 = scmp.le.s32.totalorder 1, %s17
      %p207 = scmp.lt.s32.totalorder %s17, 9
      %p208 = pnand %p206, %p207
      %p209 = pneg %p208
      // Predicated region
      $region9: #{tpu_custom_call.1} parent=5 // pred_check
        _
      $region10: #{tpu_custom_call.1} parent=5 // pred_check_branch
        %211 = sbr.rel (%p208) target = $region12
      $region11: #{tpu_custom_call.1} parent=5 // pred_region
        %s212 = ssub.s32 %s17, 1
      $region12: #{tpu_custom_call.1} parent=5 // pred_fallthru
        _
      %p213 = scmp.lt.s32.totalorder %s17, 8
      // Predicated region
      $region13: #{tpu_custom_call.1} parent=5 // pred_check
        %p214 = pneg %p213
      $region14: #{tpu_custom_call.1} parent=5 // pred_check_branch
        %216 = sbr.rel (%p214) target = $region16
      $region15: #{tpu_custom_call.1} parent=5 // pred_region
        // Predicated region
        $region17: #{tpu_custom_call.1} parent=15 // pred_check
          %p217 = pneg %p58
        $region18: #{tpu_custom_call.1} parent=15 // pred_check_branch
          %219 = sbr.rel (%p217) target = $region20
        $region19: #{tpu_custom_call.1} parent=15 // pred_region
          %s220 = smul.u32 2, %s26
          %p221 = scmp.lt.s32.totalorder %s24, 1
          %s222 = scalar_select %p221, %s24, 1
          %p223 = scmp.lt.s32.totalorder %s220, 3
          %s224 = scalar_select %p223, %s220, 3
          %s225 = smul.addr %s222, 4
          %s226 = sadd.s32 %s224, %s225
          %s227 = smul.addr %s226, 8
          %s228 = scalar_lea.vmem %s0, %s227
          %s229 = smul.u32 2, %s26
        $region20: #{tpu_custom_call.1} parent=15 // pred_fallthru
          _
        // Predicated region
        $region21: #{tpu_custom_call.1} parent=15 // pred_check
          %p230 = pneg %p86
        $region22: #{tpu_custom_call.1} parent=15 // pred_check_branch
          %232 = sbr.rel (%p230) target = $region24
        $region23: #{tpu_custom_call.1} parent=15 // pred_region
          %s233 = sand.u32 %s76, 1
          %s234 = scalar_lea.sflag [#allocation5], %s233
          %s235 = sand.u32 %s76, 1
          %s236 = smul.addr %s235, 256
          %s237 = scalar_lea.vmem [#allocation4], %s236
          %s238 = smul.u32 32, %s26
          %s240 = ssub.s32 4096, 4096
          %241 = vsyncadd %s234, %s240
          %s242 = smul.addr %s238, 2
          %s243 = sadd.s32 %s25, %s242
          %s244 = smul.addr %s243, 128
          %s245 = scalar_lea.hbm %s1, %s244
          %s246 = sshll.u32 %s237, 4
          %s247 = int_to_ptr.vmem [resolvable:$true] %s246
          %252 = dma.hbm_to_vmem [thread:$0]  %s245, 4096, %s247, %s234, 256, 128, 8
        $region24: #{tpu_custom_call.1} parent=15 // pred_fallthru
          _
        // Predicated region
        $region25: #{tpu_custom_call.1} parent=15 // pred_check
          %p253 = pneg %p112
        $region26: #{tpu_custom_call.1} parent=15 // pred_check_branch
          %255 = sbr.rel (%p253) target = $region28
        $region27: #{tpu_custom_call.1} parent=15 // pred_region
          %p256 = scmp.lt.s32.totalorder %s25, 1
          %s257 = scalar_select %p256, %s25, 1
          %s258 = scalar_lea.vmem %s2, %s257
        $region28: #{tpu_custom_call.1} parent=15 // pred_fallthru
          _
        // Predicated region
        $region29: #{tpu_custom_call.1} parent=15 // pred_check
          %p259 = pneg %p138
        $region30: #{tpu_custom_call.1} parent=15 // pred_check_branch
          %261 = sbr.rel (%p259) target = $region32
        $region31: #{tpu_custom_call.1} parent=15 // pred_region
          %s262 = smul.u32 32, %s26
          %p263 = scmp.lt.s32.totalorder %s262, 63
          %s264 = scalar_select %p263, %s262, 63
          %s265 = smul.addr %s264, 8
          %s266 = scalar_lea.vmem %s3, %s265
          %s267 = smul.u32 32, %s26
        $region32: #{tpu_custom_call.1} parent=15 // pred_fallthru
          _
        // Predicated region
        $region33: #{tpu_custom_call.1} parent=15 // pred_check
          %p268 = pneg %p164
        $region34: #{tpu_custom_call.1} parent=15 // pred_check_branch
          %270 = sbr.rel (%p268) target = $region36
        $region35: #{tpu_custom_call.1} parent=15 // pred_region
          %p271 = scmp.lt.s32.totalorder %s25, 1
          %s272 = scalar_select %p271, %s25, 1
          %s273 = smul.addr %s272, 8
          %s274 = scalar_lea.vmem %s4, %s273
        $region36: #{tpu_custom_call.1} parent=15 // pred_fallthru
          _
      $region16: #{tpu_custom_call.1} parent=5 // pred_fallthru
        _
      %p275 = scmp.le.s32.totalorder 1, %s17
      %p276 = scmp.lt.s32.totalorder %s17, 9
      %p277 = pnand %p275, %p276
      %p278 = pneg %p277
      // Predicated region
      $region37: #{tpu_custom_call.1} parent=5 // pred_check
        _
      $region38: #{tpu_custom_call.1} parent=5 // pred_check_branch
        %280 = sbr.rel (%p277) target = $region40
      $region39: #{tpu_custom_call.1} parent=5 // pred_region
        %s281 = ssub.s32 %s17, 1
        %s282 = sand.u32 %s79, 1
        %s283 = scalar_lea.sflag [#allocation5], %s282
        %s284 = sand.u32 %s79, 1
        %s285 = smul.addr %s284, 256
        %s286 = scalar_lea.vmem [#allocation4], %s285
        // Predicated region
        $region41: #{tpu_custom_call.1} parent=39 // pred_check
          %p287 = pneg %p92
        $region42: #{tpu_custom_call.1} parent=39 // pred_check_branch
          %289 = sbr.rel (%p287) target = $region44
        $region43: #{tpu_custom_call.1} parent=39 // pred_region
          %290 = dma.done %s283, 4096
        $region44: #{tpu_custom_call.1} parent=39 // pred_fallthru
          _
        %s291 = smul.u32 2, %s29
        %p292 = scmp.lt.s32.totalorder %s27, 1
        %s293 = scalar_select %p292, %s27, 1
        %p294 = scmp.lt.s32.totalorder %s291, 3
        %s295 = scalar_select %p294, %s291, 3
        %s296 = smul.addr %s293, 4
        %s297 = sadd.s32 %s295, %s296
        %s298 = smul.addr %s297, 8
        %s299 = scalar_lea.vmem %s0, %s298
        %p300 = pneg %p64
        %p301 = pneg %p61
        %s302 = sand.u32 %s79, 1
        %s303 = scalar_lea.sflag [#allocation5], %s302
        %s304 = sand.u32 %s79, 1
        %s305 = smul.addr %s304, 256
        %s306 = scalar_lea.vmem [#allocation4], %s305
        %p307 = pneg %p92
        %p308 = pneg %p89
        %p309 = scmp.lt.s32.totalorder %s28, 1
        %s310 = scalar_select %p309, %s28, 1
        %s311 = scalar_lea.vmem %s2, %s310
        %p312 = pneg %p118
        %p313 = pneg %p115
        %s314 = smul.u32 32, %s29
        %p315 = scmp.lt.s32.totalorder %s314, 63
        %s316 = scalar_select %p315, %s314, 63
        %s317 = smul.addr %s316, 8
        %s318 = scalar_lea.vmem %s3, %s317
        %p319 = pneg %p144
        %p320 = pneg %p141
        %p321 = scmp.lt.s32.totalorder %s28, 1
        %s322 = scalar_select %p321, %s28, 1
        %s323 = smul.addr %s322, 8
        %s324 = scalar_lea.vmem %s4, %s323
        %p325 = pneg %p170
        %p326 = pneg %p167
        %p327 = pneg %p198
        %p328 = pneg %p195
        %s329 = sand.u32 %s185, 1
        %s330 = scalar_lea.sflag [#allocation6], %s329
        %s331 = sand.u32 %s185, 1
        %s332 = smul.addr %s331, 8
        %s333 = scalar_lea.vmem [#allocation7], %s332
        %s334 = smul.u32 2, %s29
        %p335 = scmp.lt.s32.totalorder %s27, 1
        %s336 = scalar_select %p335, %s27, 1
        %p337 = scmp.lt.s32.totalorder %s334, 3
        %s338 = scalar_select %p337, %s334, 3
        %s339 = smul.addr %s336, 4
        %s340 = sadd.s32 %s338, %s339
        %s341 = smul.addr %s340, 8
        %s342 = scalar_lea.vmem %s0, %s341
        %s343 = smul.u32 2, %s29
        %s344 = smul.u32 32, %s29
        %p345 = scmp.lt.s32.totalorder %s28, 1
        %s346 = scalar_select %p345, %s28, 1
        %s347 = scalar_lea.vmem %s2, %s346
        %s348 = smul.u32 32, %s29
        %p349 = scmp.lt.s32.totalorder %s348, 63
        %s350 = scalar_select %p349, %s348, 63
        %s351 = smul.addr %s350, 8
        %s352 = scalar_lea.vmem %s3, %s351
        %s353 = smul.u32 32, %s29
        %p354 = scmp.lt.s32.totalorder %s28, 1
        %s355 = scalar_select %p354, %s28, 1
        %s356 = smul.addr %s355, 8
        %s357 = scalar_lea.vmem %s4, %s356
        %v358 = vld [vmem:[%s342] sm:$0xff]
        %v359 = vld [vmem:[%s342 + $0x8] sm:$0xff]
        %v360 = vld [vmem:[%s286] sm:$0xff]
        %v361 = vld [vmem:[%s286 + $0x8] sm:$0xff]
        %v362 = vld [vmem:[%s286 + $0x10] sm:$0xff]
        %v363 = vld [vmem:[%s286 + $0x18] sm:$0xff]
        %v364 = vld [vmem:[%s286 + $0x20] sm:$0xff]
        %v365 = vld [vmem:[%s286 + $0x28] sm:$0xff]
        %v366 = vld [vmem:[%s286 + $0x30] sm:$0xff]
        %v367 = vld [vmem:[%s286 + $0x38] sm:$0xff]
        %v368 = vld [vmem:[%s286 + $0x40] sm:$0xff]
        %v369 = vld [vmem:[%s286 + $0x48] sm:$0xff]
        %v370 = vld [vmem:[%s286 + $0x50] sm:$0xff]
        %v371 = vld [vmem:[%s286 + $0x58] sm:$0xff]
        %v372 = vld [vmem:[%s286 + $0x60] sm:$0xff]
        %v373 = vld [vmem:[%s286 + $0x68] sm:$0xff]
        %v374 = vld [vmem:[%s286 + $0x70] sm:$0xff]
        %v375 = vld [vmem:[%s286 + $0x78] sm:$0xff]
        %v376 = vld [vmem:[%s286 + $0x80] sm:$0xff]
        %v377 = vld [vmem:[%s286 + $0x88] sm:$0xff]
        %v378 = vld [vmem:[%s286 + $0x90] sm:$0xff]
        %v379 = vld [vmem:[%s286 + $0x98] sm:$0xff]
        %v380 = vld [vmem:[%s286 + $0xa0] sm:$0xff]
        %v381 = vld [vmem:[%s286 + $0xa8] sm:$0xff]
        %v382 = vld [vmem:[%s286 + $0xb0] sm:$0xff]
        %v383 = vld [vmem:[%s286 + $0xb8] sm:$0xff]
        %v384 = vld [vmem:[%s286 + $0xc0] sm:$0xff]
        %v385 = vld [vmem:[%s286 + $0xc8] sm:$0xff]
        %v386 = vld [vmem:[%s286 + $0xd0] sm:$0xff]
        %v387 = vld [vmem:[%s286 + $0xd8] sm:$0xff]
        %v388 = vld [vmem:[%s286 + $0xe0] sm:$0xff]
        %v389 = vld [vmem:[%s286 + $0xe8] sm:$0xff]
        %v390 = vld [vmem:[%s286 + $0xf0] sm:$0xff]
        %v391 = vld [vmem:[%s286 + $0xf8] sm:$0xff]
        %392 = vmatprep.subr.mxu0 0.0
        %393 = vmatpush1.msra.mxu0 %v360
        %394 = vmatprep.subr.mxu0 0.0
        %395 = vmatpush1.msra.mxu0 %v361
        %396 = vmatprep.subr.mxu0 0.0
        %397 = vmatpush1.msra.mxu0 %v362
        %398 = vmatprep.subr.mxu0 0.0
        %399 = vmatpush1.msra.mxu0 %v363
        %400 = vmatprep.subr.mxu0 0.0
        %401 = vmatpush1.msra.mxu0 %v364
        %402 = vmatprep.subr.mxu0 0.0
        %403 = vmatpush1.msra.mxu0 %v365
        %404 = vmatprep.subr.mxu0 0.0
        %405 = vmatpush1.msra.mxu0 %v366
        %406 = vmatprep.subr.mxu0 0.0
        %407 = vmatpush1.msra.mxu0 %v367
        %408 = vmatprep.subr.mxu0 0.0
        %409 = vmatpush1.msra.mxu0 %v368
        %410 = vmatprep.subr.mxu0 0.0
        %411 = vmatpush1.msra.mxu0 %v369
        %412 = vmatprep.subr.mxu0 0.0
        %413 = vmatpush1.msra.mxu0 %v370
        %414 = vmatprep.subr.mxu0 0.0
        %415 = vmatpush1.msra.mxu0 %v371
        %416 = vmatprep.subr.mxu0 0.0
        %417 = vmatpush1.msra.mxu0 %v372
        %418 = vmatprep.subr.mxu0 0.0
        %419 = vmatpush1.msra.mxu0 %v373
        %420 = vmatprep.subr.mxu0 0.0
        %421 = vmatpush1.msra.mxu0 %v374
        %422 = vmatprep.subr.mxu0 0.0
        %423 = vmatpush1.msra.mxu0 %v375
        %424 = vmatprep.subr.mxu0 0.0
        %425 = vmatpush1.msra.mxu0 %v376
        %426 = vmatprep.subr.mxu0 0.0
        %427 = vmatpush1.msra.mxu0 %v377
        %428 = vmatprep.subr.mxu0 0.0
        %429 = vmatpush1.msra.mxu0 %v378
        %430 = vmatprep.subr.mxu0 0.0
        %431 = vmatpush1.msra.mxu0 %v379
        %432 = vmatprep.subr.mxu0 0.0
        %433 = vmatpush1.msra.mxu0 %v380
        %434 = vmatprep.subr.mxu0 0.0
        %435 = vmatpush1.msra.mxu0 %v381
        %436 = vmatprep.subr.mxu0 0.0
        %437 = vmatpush1.msra.mxu0 %v382
        %438 = vmatprep.subr.mxu0 0.0
        %439 = vmatpush1.msra.mxu0 %v383
        %440 = vmatprep.subr.mxu0 0.0
        %441 = vmatpush1.msra.mxu0 %v384
        %442 = vmatprep.subr.mxu0 0.0
        %443 = vmatpush1.msra.mxu0 %v385
        %444 = vmatprep.subr.mxu0 0.0
        %445 = vmatpush1.msra.mxu0 %v386
        %446 = vmatprep.subr.mxu0 0.0
        %447 = vmatpush1.msra.mxu0 %v387
        %448 = vmatprep.subr.mxu0 0.0
        %449 = vmatpush1.msra.mxu0 %v388
        %450 = vmatprep.subr.mxu0 0.0
        %451 = vmatpush1.msra.mxu0 %v389
        %452 = vmatprep.subr.mxu0 0.0
        %453 = vmatpush1.msra.mxu0 %v390
        %454 = vmatprep.subr.mxu0 0.0
        %455 = vmatpush1.msra.mxu0 %v391
        %456 = vmatprep.mubr.f32.mxu0 %v359
        %457 = vmatmul.mubr.f32.gmra.mrb[0].mxu0 %v358
        %v458 = vpop.f32.mrb[0].mxu0
        %v459 = vadd.f32 0.0, %v458
        %v460 = vpop.f32.mrb[0].mxu0
        %461 = vdwg.mxu0
        %p462 = scmp.eq.s32.totalorder %s29, 0
        // Predicated region
        $region45: #{tpu_custom_call.1} parent=39 // pred_check
          %p463 = pneg %p462
        $region46: #{tpu_custom_call.1} parent=39 // pred_check_branch
          %465 = sbr.rel (%p463) target = $region48
        $region47: #{tpu_custom_call.1} parent=39 // pred_region
          %466 = vst [vmem:[#allocation2] sm:$0xff] %v459
        $region48: #{tpu_custom_call.1} parent=39 // pred_fallthru
          _
        %p467 = scmp.gt.s32.totalorder %s29, 0
        // Predicated region
        $region49: #{tpu_custom_call.1} parent=39 // pred_check
          %p468 = pneg %p467
        $region50: #{tpu_custom_call.1} parent=39 // pred_check_branch
          %470 = sbr.rel (%p468) target = $region52
        $region51: #{tpu_custom_call.1} parent=39 // pred_region
          %v471 = vld [vmem:[#allocation2] sm:$0xff]
          %v472 = vadd.f32 %v471, %v459
          %473 = vst [vmem:[#allocation2] sm:$0xff] %v472
        $region52: #{tpu_custom_call.1} parent=39 // pred_fallthru
          _
        %p474 = scmp.eq.s32.totalorder %s28, 0
        // Predicated region
        $region53: #{tpu_custom_call.1} parent=39 // pred_check
          %p475 = pneg %p474
        $region54: #{tpu_custom_call.1} parent=39 // pred_check_branch
          %477 = sbr.rel (%p475) target = $region56
        $region55: #{tpu_custom_call.1} parent=39 // pred_region
          %v478 = vld [vmem:[%s352] sm:$0xff]
          %v479 = vld [vmem:[%s352 + $0x8] sm:$0xff]
          %v480 = vld [vmem:[%s352 + $0x10] sm:$0xff]
          %v481 = vld [vmem:[%s352 + $0x18] sm:$0xff]
          %v482 = vld [vmem:[%s352 + $0x20] sm:$0xff]
          %v483 = vld [vmem:[%s352 + $0x28] sm:$0xff]
          %v484 = vld [vmem:[%s352 + $0x30] sm:$0xff]
          %v485 = vld [vmem:[%s352 + $0x38] sm:$0xff]
          %v486 = vld [vmem:[%s352 + $0x40] sm:$0xff]
          %v487 = vld [vmem:[%s352 + $0x48] sm:$0xff]
          %v488 = vld [vmem:[%s352 + $0x50] sm:$0xff]
          %v489 = vld [vmem:[%s352 + $0x58] sm:$0xff]
          %v490 = vld [vmem:[%s352 + $0x60] sm:$0xff]
          %v491 = vld [vmem:[%s352 + $0x68] sm:$0xff]
          %v492 = vld [vmem:[%s352 + $0x70] sm:$0xff]
          %v493 = vld [vmem:[%s352 + $0x78] sm:$0xff]
          %v494 = vld [vmem:[%s352 + $0x80] sm:$0xff]
          %v495 = vld [vmem:[%s352 + $0x88] sm:$0xff]
          %v496 = vld [vmem:[%s352 + $0x90] sm:$0xff]
          %v497 = vld [vmem:[%s352 + $0x98] sm:$0xff]
          %v498 = vld [vmem:[%s352 + $0xa0] sm:$0xff]
          %v499 = vld [vmem:[%s352 + $0xa8] sm:$0xff]
          %v500 = vld [vmem:[%s352 + $0xb0] sm:$0xff]
          %v501 = vld [vmem:[%s352 + $0xb8] sm:$0xff]
          %v502 = vld [vmem:[%s352 + $0xc0] sm:$0xff]
          %v503 = vld [vmem:[%s352 + $0xc8] sm:$0xff]
          %v504 = vld [vmem:[%s352 + $0xd0] sm:$0xff]
          %v505 = vld [vmem:[%s352 + $0xd8] sm:$0xff]
          %v506 = vld [vmem:[%s352 + $0xe0] sm:$0xff]
          %v507 = vld [vmem:[%s352 + $0xe8] sm:$0xff]
          %v508 = vld [vmem:[%s352 + $0xf0] sm:$0xff]
          %v509 = vld [vmem:[%s352 + $0xf8] sm:$0xff]
          %510 = vmatprep.subr.mxu0 0.0
          %511 = vmatpush1.msra.mxu0 %v478
          %512 = vmatprep.subr.mxu0 0.0
          %513 = vmatpush1.msra.mxu0 %v479
          %514 = vmatprep.subr.mxu0 0.0
          %515 = vmatpush1.msra.mxu0 %v480
          %516 = vmatprep.subr.mxu0 0.0
          %517 = vmatpush1.msra.mxu0 %v481
          %518 = vmatprep.subr.mxu0 0.0
          %519 = vmatpush1.msra.mxu0 %v482
          %520 = vmatprep.subr.mxu0 0.0
          %521 = vmatpush1.msra.mxu0 %v483
          %522 = vmatprep.subr.mxu0 0.0
          %523 = vmatpush1.msra.mxu0 %v484
          %524 = vmatprep.subr.mxu0 0.0
          %525 = vmatpush1.msra.mxu0 %v485
          %526 = vmatprep.subr.mxu0 0.0
          %527 = vmatpush1.msra.mxu0 %v486
          %528 = vmatprep.subr.mxu0 0.0
          %529 = vmatpush1.msra.mxu0 %v487
          %530 = vmatprep.subr.mxu0 0.0
          %531 = vmatpush1.msra.mxu0 %v488
          %532 = vmatprep.subr.mxu0 0.0
          %533 = vmatpush1.msra.mxu0 %v489
          %534 = vmatprep.subr.mxu0 0.0
          %535 = vmatpush1.msra.mxu0 %v490
          %536 = vmatprep.subr.mxu0 0.0
          %537 = vmatpush1.msra.mxu0 %v491
          %538 = vmatprep.subr.mxu0 0.0
          %539 = vmatpush1.msra.mxu0 %v492
          %540 = vmatprep.subr.mxu0 0.0
          %541 = vmatpush1.msra.mxu0 %v493
          %542 = vmatprep.subr.mxu0 0.0
          %543 = vmatpush1.msra.mxu0 %v494
          %544 = vmatprep.subr.mxu0 0.0
          %545 = vmatpush1.msra.mxu0 %v495
          %546 = vmatprep.subr.mxu0 0.0
          %547 = vmatpush1.msra.mxu0 %v496
          %548 = vmatprep.subr.mxu0 0.0
          %549 = vmatpush1.msra.mxu0 %v497
          %550 = vmatprep.subr.mxu0 0.0
          %551 = vmatpush1.msra.mxu0 %v498
          %552 = vmatprep.subr.mxu0 0.0
          %553 = vmatpush1.msra.mxu0 %v499
          %554 = vmatprep.subr.mxu0 0.0
          %555 = vmatpush1.msra.mxu0 %v500
          %556 = vmatprep.subr.mxu0 0.0
          %557 = vmatpush1.msra.mxu0 %v501
          %558 = vmatprep.subr.mxu0 0.0
          %559 = vmatpush1.msra.mxu0 %v502
          %560 = vmatprep.subr.mxu0 0.0
          %561 = vmatpush1.msra.mxu0 %v503
          %562 = vmatprep.subr.mxu0 0.0
          %563 = vmatpush1.msra.mxu0 %v504
          %564 = vmatprep.subr.mxu0 0.0
          %565 = vmatpush1.msra.mxu0 %v505
          %566 = vmatprep.subr.mxu0 0.0
          %567 = vmatpush1.msra.mxu0 %v506
          %568 = vmatprep.subr.mxu0 0.0
          %569 = vmatpush1.msra.mxu0 %v507
          %570 = vmatprep.subr.mxu0 0.0
          %571 = vmatpush1.msra.mxu0 %v508
          %572 = vmatprep.subr.mxu0 0.0
          %573 = vmatpush1.msra.mxu0 %v509
          %574 = vmatprep.mubr.f32.mxu0 %v359
          %575 = vmatmul.mubr.f32.gmra.mrb[0].mxu0 %v358
          %v576 = vpop.f32.mrb[0].mxu0
          %v577 = vadd.f32 0.0, %v576
          %v578 = vpop.f32.mrb[0].mxu0
          %579 = vdwg.mxu0
          // Predicated region
          $region57: #{tpu_custom_call.1} parent=55 // pred_check
            %p580 = pneg %p462
          $region58: #{tpu_custom_call.1} parent=55 // pred_check_branch
            %582 = sbr.rel (%p580) target = $region60
          $region59: #{tpu_custom_call.1} parent=55 // pred_region
            %vm583 = vcmask 64512
            %584 = vst.msk [vmem:[#allocation3] sm:$0xff] %vm583, %v577
          $region60: #{tpu_custom_call.1} parent=55 // pred_fallthru
            _
          // Predicated region
          $region61: #{tpu_custom_call.1} parent=55 // pred_check
            %p585 = pneg %p467
          $region62: #{tpu_custom_call.1} parent=55 // pred_check_branch
            %587 = sbr.rel (%p585) target = $region64
          $region63: #{tpu_custom_call.1} parent=55 // pred_region
            %v588 = vld [vmem:[#allocation3] sm:$0xff]
            %v589 = vadd.f32 %v588, %v577
            %vm590 = vcmask 64512
            %591 = vst.msk [vmem:[#allocation3] sm:$0xff] %vm590, %v589
          $region64: #{tpu_custom_call.1} parent=55 // pred_fallthru
            _
        $region56: #{tpu_custom_call.1} parent=39 // pred_fallthru
          _
        %p592 = scmp.eq.s32.totalorder %s29, 1
        // Predicated region
        $region65: #{tpu_custom_call.1} parent=39 // pred_check
          %p593 = pneg %p592
        $region66: #{tpu_custom_call.1} parent=39 // pred_check_branch
          %595 = sbr.rel (%p593) target = $region68
        $region67: #{tpu_custom_call.1} parent=39 // pred_region
          %v596 = vld [vmem:[#allocation3] sm:$0xff]
          %v597 = vld [vmem:[%s357] sm:$0xff]
          %vm598 = vcmask 64512
          %v600 = vsel %vm598, %v596, 0
          %602 = vmatprep.subr.mxu0 0.0
          %603 = vmatpush1.msra.mxu0 %v597
          %604 = vmatprep.subr.mxu0 0.0
          %605 = vmatpush1.msra.mxu0 0.0
          %606 = vmatprep.subr.mxu0 0.0
          %607 = vmatpush1.msra.mxu0 0.0
          %608 = vmatprep.subr.mxu0 0.0
          %609 = vmatpush1.msra.mxu0 0.0
          %610 = vmatprep.subr.mxu0 0.0
          %611 = vmatpush1.msra.mxu0 0.0
          %612 = vmatprep.subr.mxu0 0.0
          %613 = vmatpush1.msra.mxu0 0.0
          %614 = vmatprep.subr.mxu0 0.0
          %615 = vmatpush1.msra.mxu0 0.0
          %616 = vmatprep.subr.mxu0 0.0
          %617 = vmatpush1.msra.mxu0 0.0
          %618 = vmatprep.subr.mxu0 0.0
          %619 = vmatpush1.msra.mxu0 0.0
          %620 = vmatprep.subr.mxu0 0.0
          %621 = vmatpush1.msra.mxu0 0.0
          %622 = vmatprep.subr.mxu0 0.0
          %623 = vmatpush1.msra.mxu0 0.0
          %624 = vmatprep.subr.mxu0 0.0
          %625 = vmatpush1.msra.mxu0 0.0
          %626 = vmatprep.subr.mxu0 0.0
          %627 = vmatpush1.msra.mxu0 0.0
          %628 = vmatprep.subr.mxu0 0.0
          %629 = vmatpush1.msra.mxu0 0.0
          %630 = vmatprep.subr.mxu0 0.0
          %631 = vmatpush1.msra.mxu0 0.0
          %632 = vmatprep.subr.mxu0 0.0
          %633 = vmatpush1.msra.mxu0 0.0
          %634 = vmatprep.subr.mxu0 0.0
          %635 = vmatpush1.msra.mxu0 0.0
          %636 = vmatprep.subr.mxu0 0.0
          %637 = vmatpush1.msra.mxu0 0.0
          %638 = vmatprep.subr.mxu0 0.0
          %639 = vmatpush1.msra.mxu0 0.0
          %640 = vmatprep.subr.mxu0 0.0
          %641 = vmatpush1.msra.mxu0 0.0
          %642 = vmatprep.subr.mxu0 0.0
          %643 = vmatpush1.msra.mxu0 0.0
          %644 = vmatprep.subr.mxu0 0.0
          %645 = vmatpush1.msra.mxu0 0.0
          %646 = vmatprep.subr.mxu0 0.0
          %647 = vmatpush1.msra.mxu0 0.0
          %648 = vmatprep.subr.mxu0 0.0
          %649 = vmatpush1.msra.mxu0 0.0
          %650 = vmatprep.subr.mxu0 0.0
          %651 = vmatpush1.msra.mxu0 0.0
          %652 = vmatprep.subr.mxu0 0.0
          %653 = vmatpush1.msra.mxu0 0.0
          %654 = vmatprep.subr.mxu0 0.0
          %655 = vmatpush1.msra.mxu0 0.0
          %656 = vmatprep.subr.mxu0 0.0
          %657 = vmatpush1.msra.mxu0 0.0
          %658 = vmatprep.subr.mxu0 0.0
          %659 = vmatpush1.msra.mxu0 0.0
          %660 = vmatprep.subr.mxu0 0.0
          %661 = vmatpush1.msra.mxu0 0.0
          %662 = vmatprep.subr.mxu0 0.0
          %663 = vmatpush1.msra.mxu0 0.0
          %664 = vmatprep.subr.mxu0 0.0
          %665 = vmatpush1.msra.mxu0 0.0
          %666 = vmatprep.mubr.f32.mxu0 0.0
          %667 = vmatmul.mubr.f32.gmra.mrb[0].mxu0 %v600
          %v668 = vpop.f32.mrb[0].mxu0
          %v669 = vadd.f32 0.0, %v668
          %v670 = vpop.f32.mrb[0].mxu0
          %671 = vdwg.mxu0
          %v672 = vld [vmem:[#allocation2] sm:$0xff]
          %v673 = vld [vmem:[%s347] sm:$0x1]
          %v675 = vlaneseq
          %v676 = vshrl.u32 %v675, 7
          %v677 = vsub.s32 0, %v676
          %v678 = vrot.slane %v673, %v677
          %v680 = vadd.f32 %v672, %v678
          %v681 = vadd.f32 %v680, %v669
          %682 = vst [vmem:[%s333] sm:$0xff] %v681
        $region68: #{tpu_custom_call.1} parent=39 // pred_fallthru
          _
        %s683 = sand.u32 %s185, 1
        %s684 = scalar_lea.sflag [#allocation6], %s683
        %s685 = sand.u32 %s185, 1
        %s686 = smul.addr %s685, 8
        %s687 = scalar_lea.vmem [#allocation7], %s686
        // Predicated region
        $region69: #{tpu_custom_call.1} parent=39 // pred_check
          %p688 = pneg %p195
        $region70: #{tpu_custom_call.1} parent=39 // pred_check_branch
          %690 = sbr.rel (%p688) target = $region72
        $region71: #{tpu_custom_call.1} parent=39 // pred_region
          %s692 = ssub.s32 128, 128
          %693 = vsyncadd %s684, %s692
          %s694 = smul.addr %s27, 2
          %s695 = sadd.s32 %s28, %s694
          %s696 = smul.addr %s695, 128
          %s697 = scalar_lea.hbm %s5, %s696
          %s699 = sshll.u32 %s687, 4
          %s700 = int_to_ptr.vmem [resolvable:$true] %s699
          %702 = dma.vmem_to_hbm [thread:$0]  %s700, 128, %s697, %s684
        $region72: #{tpu_custom_call.1} parent=39 // pred_fallthru
          _
      $region40: #{tpu_custom_call.1} parent=5 // pred_fallthru
        _
      %p703 = scmp.le.s32.totalorder 2, %s17
      // Predicated region
      $region73: #{tpu_custom_call.1} parent=5 // pred_check
        %p704 = pneg %p703
      $region74: #{tpu_custom_call.1} parent=5 // pred_check_branch
        %706 = sbr.rel (%p704) target = $region76
      $region75: #{tpu_custom_call.1} parent=5 // pred_region
        %s707 = ssub.s32 %s17, 2
        // Predicated region
        $region77: #{tpu_custom_call.1} parent=75 // pred_check
          %p708 = pneg %p201
        $region78: #{tpu_custom_call.1} parent=75 // pred_check_branch
          %710 = sbr.rel (%p708) target = $region80
        $region79: #{tpu_custom_call.1} parent=75 // pred_region
          %s711 = sand.u32 %s186, 1
          %s712 = scalar_lea.sflag [#allocation6], %s711
          %s713 = sand.u32 %s186, 1
          %s714 = smul.addr %s713, 8
          %s715 = scalar_lea.vmem [#allocation7], %s714
          %716 = dma.done %s712, 128
        $region80: #{tpu_custom_call.1} parent=75 // pred_fallthru
          _
      $region76: #{tpu_custom_call.1} parent=5 // pred_fallthru
        _
    $region6: #{tpu_custom_call.1} parent=1 // loop_footer
      %s21 = sadd.s32 1, %s17
    $region7: #{tpu_custom_call.1} parent=1 // loop_footer_branch
      %16 = sbr.rel target = $region3
    $region8: #{tpu_custom_call.1} parent=1 // loop_exit
      _
    %717 = vsyncpa [#allocation5], 1
    %s718 = scalar_lea.sflag [#allocation5], 1
    %719 = vsyncpa %s718, 1
    %720 = vsyncpa [#allocation6], 1
    %s721 = scalar_lea.sflag [#allocation6], 1
    %722 = vsyncpa %s721, 1

</llo_original>
